<compile_context>
chip_gen: v7x
topology: tpu7x:2x2x1
jax: 0.10.0
libtpu: 0.0.40
codegen_flags: <defaults>
</compile_context>

<pallas_src>
import jax
import jax.numpy as jnp
from jax.experimental import pallas as pl
from jax.experimental.pallas import tpu as pltpu

# ---- model hyper-parameters (small, synthetic) -------------------------------
IMAGE_SIZE = 64          # predictor.model.image_size[1]  (real SAM: 1024)
PATCH = 16               # stand-in patch-embed stride for the image encoder
EMBED_DIM = 32           # embedding channels of the stand-in encoder
PIXEL_MEAN = (123.675 / 255.0, 116.28 / 255.0, 103.53 / 255.0)
PIXEL_STD = (58.395 / 255.0, 57.12 / 255.0, 57.375 / 255.0)

# MXU/DMA operand dtype (f32 accumulation kept in-kernel).
# TODO(synk): on v7x only, fp8 operands (with per-tile scaling) would ~halve pT HBM
# bytes again; not portable to v5e/v6e MXUs, so bf16 stays the cross-generation default.
MXU_DTYPE = jnp.bfloat16

# Patch-column tile.  2048 amortizes per-step pipeline overhead (~0.35us) while keeping
# the grid length 2 at real SAM scale (M=4096), so "parallel" still shards v7x's 2 TCs.
# VMEM: 2 x ~3MB bf16 pT buffers + ~6MB f32 upcast temp + 0.25MB acc + 48KB weights
# stays well under the 32MiB default scoped-VMEM limit.
M_TILE = 2048


# ---- Pallas kernel ------------------------------------------------------------
def _patch_embed_kernel(wT_ref, pT_ref, b_ref, o_ref):
    # (E, K) @ (K, tm), f32 accumulation on the MXU, f32 bias epilogue on the VPU.
    # Operands arrive as bf16 (half the HBM bytes) and are upcast here; this avoids the
    # interpret/CPU "BF16 x BF16 = F32" DotThunk limitation while keeping TPU semantics.
    # NOTE (review): the (E=32)-row LHS under-fills the 256-row MXU on v6e/v7x — harmless
    # for this HBM-bound stand-in, but tile E to >=256/128 per MXU pass once the real
    # encoder's E grows; keep M on the lane axis to preserve unmasked vst stores.
    w = wT_ref[...].astype(jnp.float32)
    p = pT_ref[...].astype(jnp.float32)
    acc = jnp.dot(w, p, preferred_element_type=jnp.float32)
    o_ref[...] = acc + b_ref[...]


def _patch_embed_pallas(wT, pT, b_col):
    """wT: (E, K) bf16, pT: (K, M) bf16, b_col: (E, 1) f32  ->  (E, M) f32."""
    E, K = wT.shape
    _, M = pT.shape
    tm = M if M <= M_TILE else M_TILE
    grid = (pl.cdiv(M, tm),)
    return pl.pallas_call(
        _patch_embed_kernel,
        out_shape=jax.ShapeDtypeStruct((E, M), jnp.float32),
        grid=grid,
        in_specs=[
            pl.BlockSpec((E, K), lambda i: (0, 0)),    # weights: VMEM-resident
            pl.BlockSpec((K, tm), lambda i: (0, i)),   # stream patch-column tiles
            pl.BlockSpec((E, 1), lambda i: (0, 0)),    # bias: VMEM-resident
        ],
        out_specs=pl.BlockSpec((E, tm), lambda i: (0, i)),  # lane axis = M (lane-dense at real scale)
        compiler_params=pltpu.CompilerParams(
            dimension_semantics=("parallel",),          # shards across v7x's 2 TCs (no-op v5e/v6e)
            # Allow XLA to fuse the pad/cast/patchify producer into the pT input
            # instead of materializing a bf16 pT intermediate in HBM.
            allow_input_fusion=[False, True, False],
        ),
    )(wT, pT, b_col)


# ---- one-time parameter preparation (reused across frames) --------------------
def prepare_encoder_params(w_patch, b_patch, use_preprocess=True):
    """Folds (x/255 - mean)/std into the patch-embed weights/bias (use_preprocess=True)
    and pre-transposes/casts the weights for the kernel.  Call once, reuse per frame."""
    E = w_patch.shape[1]
    w32 = w_patch.astype(jnp.float32)
    if use_preprocess:
        mean = jnp.asarray(PIXEL_MEAN, jnp.float32)
        std = jnp.asarray(PIXEL_STD, jnp.float32)
        # w_patch rows are ordered (C, ph, pw); build matching per-row affine.
        s_row = jnp.repeat(1.0 / (255.0 * std), PATCH * PATCH)      # (K,)
        t_row = jnp.repeat(-mean / std, PATCH * PATCH)               # (K,)
        w_eff = w32 * s_row[:, None]                                 # (K, E)
        b_eff = b_patch.reshape(-1).astype(jnp.float32) + t_row @ w32  # (E,)
    else:
        w_eff = w32
        b_eff = b_patch.reshape(-1).astype(jnp.float32)
    return w_eff.T.astype(MXU_DTYPE), b_eff.reshape(E, 1)            # (E, K) bf16, (E, 1) f32


# ---- full EncoderModel.forward ------------------------------------------------
# TODO(synk): the real EfficientViT-SAM image encoder (conv stages + EfficientViT
# attention blocks) lives outside this module; a single patch-embedding matmul is
# used as the representative Pallas hot path producing NCHW embeddings.
def encoder_model_forward(image, wT_eff, b_col, use_preprocess=True):
    P, IS = PATCH, IMAGE_SIZE
    gh = gw = IS // P
    E = wT_eff.shape[0]

    if use_preprocess:
        # SamResize: long side already == IMAGE_SIZE -> identity (HWC handled below).
        # TODO(synk): bilinear-resize branch of SamResize (long_side != size) not implemented.
        H, W, C = image.shape
        mean = jnp.asarray(PIXEL_MEAN, jnp.float32)
        # Pad the *raw* image with 255*mean per channel so the folded affine maps the
        # padded region to (numerically) 0, matching F.pad(value=0) applied after
        # Normalize.  Cast to bf16 BEFORE the patchify transpose so the XLA pad and
        # transpose legs move half the bytes (review).
        pad_fill = jnp.broadcast_to(
            (255.0 * mean).astype(MXU_DTYPE)[None, None, :], (IS, IS, C))
        padded_hwc = pad_fill.at[:H, :W, :].set(image.astype(MXU_DTYPE))
        # Fused HWC->CHW + patchify straight to P^T (K ordered (C, ph, pw) to match
        # the w_patch row order):
        # (IS,IS,C) -> (gh,ph,gw,pw,C) -> (C,ph,pw,gh,gw) -> (K, M)
        # TODO(synk): highest-value remaining change per review — eliminate this pT
        # materialization entirely by permuting w_patch rows to (ph,pw,C) order and
        # streaming (rows*P, IS, C) image slabs into the kernel with in-kernel
        # relayout; kept as XLA ops + allow_input_fusion here for lowering robustness.
        pT = (padded_hwc.reshape(gh, P, gw, P, C)
              .transpose(4, 1, 3, 0, 2)
              .reshape(C * P * P, gh * gw))
    else:
        # Caller supplies an already-preprocessed (1, C, IS, IS) tensor.
        x = image.reshape(image.shape[-3], IS, IS).astype(MXU_DTYPE)
        C = x.shape[0]
        pT = (x.reshape(C, gh, P, gw, P)
              .transpose(0, 2, 4, 1, 3)
              .reshape(C * P * P, gh * gw))

    out = _patch_embed_pallas(wT_eff, pT, b_col)
    # (E, M) with M enumerated (gh, gw) row-major -> (1, E, gh, gw): pure reshape,
    # no post-kernel transpose / extra HBM round trip.
    return out.reshape(1, E, gh, gw)


# ---- pure-JAX f32 references (PyTorch semantics) ------------------------------
def _preprocess_ref_f32(image_hwc):
    mean = jnp.asarray(PIXEL_MEAN, jnp.float32)
    std = jnp.asarray(PIXEL_STD, jnp.float32)
    H, W, _ = image_hwc.shape
    x = jnp.transpose(image_hwc.astype(jnp.float32), (2, 0, 1)) / 255.0
    x = (x - mean[:, None, None]) / std[:, None, None]
    x = jnp.pad(x, ((0, 0), (0, IMAGE_SIZE - H), (0, IMAGE_SIZE - W)))
    return x[None]  # (1, C, IS, IS)


def _encoder_ref_f32(image_hwc, w_patch, b_patch):
    P, IS = PATCH, IMAGE_SIZE
    gh = gw = IS // P
    x = _preprocess_ref_f32(image_hwc)[0]
    C = x.shape[0]
    p = (x.reshape(C, gh, P, gw, P).transpose(1, 3, 0, 2, 4)
         .reshape(gh * gw, C * P * P))
    out = p @ w_patch + b_patch.reshape(1, -1)
    return out.reshape(1, gh, gw, -1).transpose(0, 3, 1, 2)


if __name__ == "__main__":
    key = jax.random.PRNGKey(0)
    k_img, k_w, k_b = jax.random.split(key, 3)

    # NOTE (review): tuning conclusions (M_TILE, parallel semantics, dtypes) are only
    # measurable at real SAM resolution (IMAGE_SIZE=1024, M=4096); this toy size is a
    # correctness/smoke test only.
    H, W = 48, 64  # small HWC image in 0..255 float, long side == IMAGE_SIZE
    image_hwc = jax.random.uniform(k_img, (H, W, 3), jnp.float32, 0.0, 255.0)

    patch_dim = 3 * PATCH * PATCH
    w_patch = jax.random.normal(k_w, (patch_dim, EMBED_DIM), jnp.float32) * 0.02
    b_patch = jax.random.normal(k_b, (1, EMBED_DIM), jnp.float32) * 0.02

    fwd = jax.jit(encoder_model_forward, static_argnames=("use_preprocess",))

    # One-time weight folding, reused across frames.
    wT_eff, b_col = prepare_encoder_params(w_patch, b_patch, use_preprocess=True)
    emb = jax.block_until_ready(fwd(image_hwc, wT_eff, b_col))
    assert emb.shape == (1, EMBED_DIM, IMAGE_SIZE // PATCH, IMAGE_SIZE // PATCH), emb.shape
    assert emb.dtype == jnp.float32

    ref = _encoder_ref_f32(image_hwc, w_patch, b_patch)
    err = float(jnp.max(jnp.abs(emb - ref)))
    assert err < 5e-2, f"max abs err vs f32 reference: {err}"

    # use_preprocess=False path: caller supplies an already-preprocessed tensor.
    wT_raw, b_raw = prepare_encoder_params(w_patch, b_patch, use_preprocess=False)
    x_pre = _preprocess_ref_f32(image_hwc)
    emb2 = jax.block_until_ready(fwd(x_pre, wT_raw, b_raw, use_preprocess=False))
    err2 = float(jnp.max(jnp.abs(emb2 - ref)))
    assert emb2.shape == emb.shape
    assert err2 < 5e-2, f"max abs err (no-preprocess path) vs f32 reference: {err2}"

    print("KERNEL_OK")
</pallas_src>

<mosaic_0001>
module attributes {stable_mosaic.version = 11 : i64} {
  func.func @_patch_embed_kernel(%arg0: i32, %arg1: memref<32x768xbf16, #tpu.memory_space<vmem>>, %arg2: memref<768x16xbf16, #tpu.memory_space<vmem>>, %arg3: memref<32x1xf32, #tpu.memory_space<vmem>>, %arg4: memref<32x16xf32, #tpu.memory_space<vmem>>) attributes {dimension_semantics = [#tpu.dimension_semantics<parallel>], iteration_bounds = array<i64: 1>, scalar_prefetch = 0 : i64, scratch_operands = 0 : i64, tpu.core_type = #tpu.core_type<tc>, window_params = [{pipeline_mode = #tpu.pipeline_mode<synchronous>, transform_indices = @transform_0, window_bounds = array<i64: 32, 768>}, {transform_indices = @transform_1, window_bounds = array<i64: 768, 16>}, {pipeline_mode = #tpu.pipeline_mode<synchronous>, transform_indices = @transform_2, window_bounds = array<i64: 32, 1>}, {transform_indices = @transform_3, window_bounds = array<i64: 32, 16>}]} {
    %c0 = arith.constant 0 : index
    %c0_0 = arith.constant 0 : index
    %0 = vector.load %arg1[%c0, %c0_0] : memref<32x768xbf16, #tpu.memory_space<vmem>>, vector<32x768xbf16>
    %1 = arith.extf %0 : vector<32x768xbf16> to vector<32x768xf32>
    %c0_1 = arith.constant 0 : index
    %c0_2 = arith.constant 0 : index
    %2 = vector.load %arg2[%c0_1, %c0_2] : memref<768x16xbf16, #tpu.memory_space<vmem>>, vector<768x16xbf16>
    %3 = arith.extf %2 : vector<768x16xbf16> to vector<768x16xf32>
    %cst = arith.constant dense<0.000000e+00> : vector<32x16xf32>
    %4 = tpu.matmul %1, %3, %cst {dimension_numbers = #tpu.dot_dimension_numbers<[1], [0], [0], [1], [0, 0, 1, 1], [], []>} : vector<32x768xf32>, vector<768x16xf32>, vector<32x16xf32> -> vector<32x16xf32>
    %c0_3 = arith.constant 0 : index
    %c0_4 = arith.constant 0 : index
    %5 = vector.load %arg3[%c0_3, %c0_4] : memref<32x1xf32, #tpu.memory_space<vmem>>, vector<32x1xf32>
    %6 = vector.broadcast %5 : vector<32x1xf32> to vector<32x16xf32>
    %7 = arith.addf %4, %6 : vector<32x16xf32>
    %c0_5 = arith.constant 0 : index
    %c0_6 = arith.constant 0 : index
    %8 = vector.load %arg4[%c0_5, %c0_6] : memref<32x16xf32, #tpu.memory_space<vmem>>, vector<32x16xf32>
    tpu.vector_store %arg4[%c0_5, %c0_6], %7 {strides = array<i32>} : memref<32x16xf32, #tpu.memory_space<vmem>>, vector<32x16xf32>,
    return
  }
  func.func @transform_0(%arg0: i32) -> (i32, i32) {
    %c0_i32 = arith.constant 0 : i32
    %c0_i32_0 = arith.constant 0 : i32
    %c0_i32_1 = arith.constant 0 : i32
    return %c0_i32, %c0_i32_0 : i32, i32
  }
  func.func @transform_1(%arg0: i32) -> (i32, i32) {
    %c0_i32 = arith.constant 0 : i32
    %c0_i32_0 = arith.constant 0 : i32
    return %c0_i32, %arg0 : i32, i32
  }
  func.func @transform_2(%arg0: i32) -> (i32, i32) {
    %c0_i32 = arith.constant 0 : i32
    %c0_i32_0 = arith.constant 0 : i32
    %c0_i32_1 = arith.constant 0 : i32
    return %c0_i32, %c0_i32_0 : i32, i32
  }
  func.func @transform_3(%arg0: i32) -> (i32, i32) {
    %c0_i32 = arith.constant 0 : i32
    %c0_i32_0 = arith.constant 0 : i32
    return %c0_i32, %arg0 : i32, i32
  }
}

</mosaic_0001>

<llo_original>
// kernel: encoder_model_forward.1
$region0: #{encoder_model_forward.1}
  #allocation0 [shape = 'u32[]', space=smem, size = 0x4, offset = 0x4, fixed_abs, tag = 'smem constant byte address 0x4 - core index']
  #allocation1 [shape = 'u32[144,128]{1,0:T(1,128)}', space=vmem, size = 0x12000, scoped, tag = 'internal scratch']
  %s0 = inlined_call_operand.vmem [shape: bf16[32,768], index: 0, kind: input, shape index: {}]
  %s1 = inlined_call_operand.vmem [shape: bf16[768,16], index: 1, kind: input, shape index: {}]
  %s2 = inlined_call_operand.vmem [shape: f32[32,1], index: 2, kind: input, shape index: {}]
  %s3 = inlined_call_operand.vmem [shape: f32[32,16], index: 3, kind: output, shape index: {}]
  %s4 = sld [smem:[#allocation0]]
  $region22: #{encoder_model_forward.1} parent=0
    _
  %s6 = ssub.s32 1, %s4
  %s7 = scalar_select 0, %s6, %s4
  // Predicated region
  $region2: #{encoder_model_forward.1} parent=0 // pred_check
    _
  $region3: #{encoder_model_forward.1} parent=0 // pred_check_branch
    %9 = sbr.rel (0) target = $region5
  $region4: #{encoder_model_forward.1} parent=0 // pred_region
    _
  $region5: #{encoder_model_forward.1} parent=0 // pred_fallthru
    _
  // Predicated region
  $region6: #{encoder_model_forward.1} parent=0 // pred_check
    _
  $region7: #{encoder_model_forward.1} parent=0 // pred_check_branch
    %11 = sbr.rel (0) target = $region9
  $region8: #{encoder_model_forward.1} parent=0 // pred_region
    _
  $region9: #{encoder_model_forward.1} parent=0 // pred_fallthru
    _
  // Predicated region
  $region10: #{encoder_model_forward.1} parent=0 // pred_check
    _
  $region11: #{encoder_model_forward.1} parent=0 // pred_check_branch
    %13 = sbr.rel (0) target = $region13
  $region12: #{encoder_model_forward.1} parent=0 // pred_region
    _
  $region13: #{encoder_model_forward.1} parent=0 // pred_fallthru
    _
  %v14 = vld [vmem:[%s0] sm:$0xff]
  %v15 = vld [vmem:[%s0 + $0x8] sm:$0xff]
  %v16 = vld [vmem:[%s0 + $0x10] sm:$0xff]
  %v17 = vld [vmem:[%s0 + $0x18] sm:$0xff]
  %v18 = vld [vmem:[%s0 + $0x20] sm:$0xff]
  %v19 = vld [vmem:[%s0 + $0x28] sm:$0xff]
  %v20 = vld [vmem:[%s0 + $0x30] sm:$0xff]
  %v21 = vld [vmem:[%s0 + $0x38] sm:$0xff]
  %v22 = vld [vmem:[%s0 + $0x40] sm:$0xff]
  %v23 = vld [vmem:[%s0 + $0x48] sm:$0xff]
  %v24 = vld [vmem:[%s0 + $0x50] sm:$0xff]
  %v25 = vld [vmem:[%s0 + $0x58] sm:$0xff]
  %v26 = vunpack.c.l.bf16 %v14
  %v27 = vunpack.c.h.bf16 %v14
  %v28 = vunpack.c.l.bf16 %v15
  %v29 = vunpack.c.h.bf16 %v15
  %v30 = vunpack.c.l.bf16 %v16
  %v31 = vunpack.c.h.bf16 %v16
  %v32 = vunpack.c.l.bf16 %v17
  %v33 = vunpack.c.h.bf16 %v17
  %v34 = vunpack.c.l.bf16 %v18
  %v35 = vunpack.c.h.bf16 %v18
  %v36 = vunpack.c.l.bf16 %v19
  %v37 = vunpack.c.h.bf16 %v19
  %v38 = vunpack.c.l.bf16 %v20
  %v39 = vunpack.c.h.bf16 %v20
  %v40 = vunpack.c.l.bf16 %v21
  %v41 = vunpack.c.h.bf16 %v21
  %v42 = vunpack.c.l.bf16 %v22
  %v43 = vunpack.c.h.bf16 %v22
  %v44 = vunpack.c.l.bf16 %v23
  %v45 = vunpack.c.h.bf16 %v23
  %v46 = vunpack.c.l.bf16 %v24
  %v47 = vunpack.c.h.bf16 %v24
  %v48 = vunpack.c.l.bf16 %v25
  %v49 = vunpack.c.h.bf16 %v25
  %v50 = vld [vmem:[%s1] sm:$0xf]
  %v51 = vld [vmem:[%s1 + $0x4] sm:$0xf]
  %v52 = vld [vmem:[%s1 + $0x8] sm:$0xf]
  %v53 = vld [vmem:[%s1 + $0xc] sm:$0xf]
  %v54 = vld [vmem:[%s1 + $0x10] sm:$0xf]
  %v55 = vld [vmem:[%s1 + $0x14] sm:$0xf]
  %v56 = vld [vmem:[%s1 + $0x18] sm:$0xf]
  %v57 = vld [vmem:[%s1 + $0x1c] sm:$0xf]
  %v58 = vld [vmem:[%s1 + $0x20] sm:$0xf]
  %v59 = vld [vmem:[%s1 + $0x24] sm:$0xf]
  %v60 = vld [vmem:[%s1 + $0x28] sm:$0xf]
  %v61 = vld [vmem:[%s1 + $0x2c] sm:$0xf]
  %v62 = vld [vmem:[%s1 + $0x30] sm:$0xf]
  %v63 = vld [vmem:[%s1 + $0x34] sm:$0xf]
  %v64 = vld [vmem:[%s1 + $0x38] sm:$0xf]
  %v65 = vld [vmem:[%s1 + $0x3c] sm:$0xf]
  %v66 = vld [vmem:[%s1 + $0x40] sm:$0xf]
  %v67 = vld [vmem:[%s1 + $0x44] sm:$0xf]
  %v68 = vld [vmem:[%s1 + $0x48] sm:$0xf]
  %v69 = vld [vmem:[%s1 + $0x4c] sm:$0xf]
  %v70 = vld [vmem:[%s1 + $0x50] sm:$0xf]
  %v71 = vld [vmem:[%s1 + $0x54] sm:$0xf]
  %v72 = vld [vmem:[%s1 + $0x58] sm:$0xf]
  %v73 = vld [vmem:[%s1 + $0x5c] sm:$0xf]
  %v74 = vld [vmem:[%s1 + $0x60] sm:$0xf]
  %v75 = vld [vmem:[%s1 + $0x64] sm:$0xf]
  %v76 = vld [vmem:[%s1 + $0x68] sm:$0xf]
  %v77 = vld [vmem:[%s1 + $0x6c] sm:$0xf]
  %v78 = vld [vmem:[%s1 + $0x70] sm:$0xf]
  %v79 = vld [vmem:[%s1 + $0x74] sm:$0xf]
  %v80 = vld [vmem:[%s1 + $0x78] sm:$0xf]
  %v81 = vld [vmem:[%s1 + $0x7c] sm:$0xf]
  %v82 = vld [vmem:[%s1 + $0x80] sm:$0xf]
  %v83 = vld [vmem:[%s1 + $0x84] sm:$0xf]
  %v84 = vld [vmem:[%s1 + $0x88] sm:$0xf]
  %v85 = vld [vmem:[%s1 + $0x8c] sm:$0xf]
  %v86 = vld [vmem:[%s1 + $0x90] sm:$0xf]
  %v87 = vld [vmem:[%s1 + $0x94] sm:$0xf]
  %v88 = vld [vmem:[%s1 + $0x98] sm:$0xf]
  %v89 = vld [vmem:[%s1 + $0x9c] sm:$0xf]
  %v90 = vld [vmem:[%s1 + $0xa0] sm:$0xf]
  %v91 = vld [vmem:[%s1 + $0xa4] sm:$0xf]
  %v92 = vld [vmem:[%s1 + $0xa8] sm:$0xf]
  %v93 = vld [vmem:[%s1 + $0xac] sm:$0xf]
  %v94 = vld [vmem:[%s1 + $0xb0] sm:$0xf]
  %v95 = vld [vmem:[%s1 + $0xb4] sm:$0xf]
  %v96 = vld [vmem:[%s1 + $0xb8] sm:$0xf]
  %v97 = vld [vmem:[%s1 + $0xbc] sm:$0xf]
  %v98 = vld [vmem:[%s1 + $0xc0] sm:$0xf]
  %v99 = vld [vmem:[%s1 + $0xc4] sm:$0xf]
  %v100 = vld [vmem:[%s1 + $0xc8] sm:$0xf]
  %v101 = vld [vmem:[%s1 + $0xcc] sm:$0xf]
  %v102 = vld [vmem:[%s1 + $0xd0] sm:$0xf]
  %v103 = vld [vmem:[%s1 + $0xd4] sm:$0xf]
  %v104 = vld [vmem:[%s1 + $0xd8] sm:$0xf]
  %v105 = vld [vmem:[%s1 + $0xdc] sm:$0xf]
  %v106 = vld [vmem:[%s1 + $0xe0] sm:$0xf]
  %v107 = vld [vmem:[%s1 + $0xe4] sm:$0xf]
  %v108 = vld [vmem:[%s1 + $0xe8] sm:$0xf]
  %v109 = vld [vmem:[%s1 + $0xec] sm:$0xf]
  %v110 = vld [vmem:[%s1 + $0xf0] sm:$0xf]
  %v111 = vld [vmem:[%s1 + $0xf4] sm:$0xf]
  %v112 = vld [vmem:[%s1 + $0xf8] sm:$0xf]
  %v113 = vld [vmem:[%s1 + $0xfc] sm:$0xf]
  %v114 = vld [vmem:[%s1 + $0x100] sm:$0xf]
  %v115 = vld [vmem:[%s1 + $0x104] sm:$0xf]
  %v116 = vld [vmem:[%s1 + $0x108] sm:$0xf]
  %v117 = vld [vmem:[%s1 + $0x10c] sm:$0xf]
  %v118 = vld [vmem:[%s1 + $0x110] sm:$0xf]
  %v119 = vld [vmem:[%s1 + $0x114] sm:$0xf]
  %v120 = vld [vmem:[%s1 + $0x118] sm:$0xf]
  %v121 = vld [vmem:[%s1 + $0x11c] sm:$0xf]
  %v122 = vld [vmem:[%s1 + $0x120] sm:$0xf]
  %v123 = vld [vmem:[%s1 + $0x124] sm:$0xf]
  %v124 = vld [vmem:[%s1 + $0x128] sm:$0xf]
  %v125 = vld [vmem:[%s1 + $0x12c] sm:$0xf]
  %v126 = vld [vmem:[%s1 + $0x130] sm:$0xf]
  %v127 = vld [vmem:[%s1 + $0x134] sm:$0xf]
  %v128 = vld [vmem:[%s1 + $0x138] sm:$0xf]
  %v129 = vld [vmem:[%s1 + $0x13c] sm:$0xf]
  %v130 = vld [vmem:[%s1 + $0x140] sm:$0xf]
  %v131 = vld [vmem:[%s1 + $0x144] sm:$0xf]
  %v132 = vld [vmem:[%s1 + $0x148] sm:$0xf]
  %v133 = vld [vmem:[%s1 + $0x14c] sm:$0xf]
  %v134 = vld [vmem:[%s1 + $0x150] sm:$0xf]
  %v135 = vld [vmem:[%s1 + $0x154] sm:$0xf]
  %v136 = vld [vmem:[%s1 + $0x158] sm:$0xf]
  %v137 = vld [vmem:[%s1 + $0x15c] sm:$0xf]
  %v138 = vld [vmem:[%s1 + $0x160] sm:$0xf]
  %v139 = vld [vmem:[%s1 + $0x164] sm:$0xf]
  %v140 = vld [vmem:[%s1 + $0x168] sm:$0xf]
  %v141 = vld [vmem:[%s1 + $0x16c] sm:$0xf]
  %v142 = vld [vmem:[%s1 + $0x170] sm:$0xf]
  %v143 = vld [vmem:[%s1 + $0x174] sm:$0xf]
  %v144 = vld [vmem:[%s1 + $0x178] sm:$0xf]
  %v145 = vld [vmem:[%s1 + $0x17c] sm:$0xf]
  %v146 = vunpack.c.l.bf16 %v50
  %v147 = vunpack.c.l.bf16 %v51
  %v148 = vunpack.c.l.bf16 %v52
  %v149 = vunpack.c.l.bf16 %v53
  %v150 = vunpack.c.l.bf16 %v54
  %v151 = vunpack.c.l.bf16 %v55
  %v152 = vunpack.c.l.bf16 %v56
  %v153 = vunpack.c.l.bf16 %v57
  %v154 = vunpack.c.l.bf16 %v58
  %v155 = vunpack.c.l.bf16 %v59
  %v156 = vunpack.c.l.bf16 %v60
  %v157 = vunpack.c.l.bf16 %v61
  %v158 = vunpack.c.l.bf16 %v62
  %v159 = vunpack.c.l.bf16 %v63
  %v160 = vunpack.c.l.bf16 %v64
  %v161 = vunpack.c.l.bf16 %v65
  %v162 = vunpack.c.l.bf16 %v66
  %v163 = vunpack.c.l.bf16 %v67
  %v164 = vunpack.c.l.bf16 %v68
  %v165 = vunpack.c.l.bf16 %v69
  %v166 = vunpack.c.l.bf16 %v70
  %v167 = vunpack.c.l.bf16 %v71
  %v168 = vunpack.c.l.bf16 %v72
  %v169 = vunpack.c.l.bf16 %v73
  %v170 = vunpack.c.l.bf16 %v74
  %v171 = vunpack.c.l.bf16 %v75
  %v172 = vunpack.c.l.bf16 %v76
  %v173 = vunpack.c.l.bf16 %v77
  %v174 = vunpack.c.l.bf16 %v78
  %v175 = vunpack.c.l.bf16 %v79
  %v176 = vunpack.c.l.bf16 %v80
  %v177 = vunpack.c.l.bf16 %v81
  %v178 = vunpack.c.l.bf16 %v82
  %v179 = vunpack.c.l.bf16 %v83
  %v180 = vunpack.c.l.bf16 %v84
  %v181 = vunpack.c.l.bf16 %v85
  %v182 = vunpack.c.l.bf16 %v86
  %v183 = vunpack.c.l.bf16 %v87
  %v184 = vunpack.c.l.bf16 %v88
  %v185 = vunpack.c.l.bf16 %v89
  %v186 = vunpack.c.l.bf16 %v90
  %v187 = vunpack.c.l.bf16 %v91
  %v188 = vunpack.c.l.bf16 %v92
  %v189 = vunpack.c.l.bf16 %v93
  %v190 = vunpack.c.l.bf16 %v94
  %v191 = vunpack.c.l.bf16 %v95
  %v192 = vunpack.c.l.bf16 %v96
  %v193 = vunpack.c.l.bf16 %v97
  %v194 = vunpack.c.l.bf16 %v98
  %v195 = vunpack.c.l.bf16 %v99
  %v196 = vunpack.c.l.bf16 %v100
  %v197 = vunpack.c.l.bf16 %v101
  %v198 = vunpack.c.l.bf16 %v102
  %v199 = vunpack.c.l.bf16 %v103
  %v200 = vunpack.c.l.bf16 %v104
  %v201 = vunpack.c.l.bf16 %v105
  %v202 = vunpack.c.l.bf16 %v106
  %v203 = vunpack.c.l.bf16 %v107
  %v204 = vunpack.c.l.bf16 %v108
  %v205 = vunpack.c.l.bf16 %v109
  %v206 = vunpack.c.l.bf16 %v110
  %v207 = vunpack.c.l.bf16 %v111
  %v208 = vunpack.c.l.bf16 %v112
  %v209 = vunpack.c.l.bf16 %v113
  %v210 = vunpack.c.l.bf16 %v114
  %v211 = vunpack.c.l.bf16 %v115
  %v212 = vunpack.c.l.bf16 %v116
  %v213 = vunpack.c.l.bf16 %v117
  %v214 = vunpack.c.l.bf16 %v118
  %v215 = vunpack.c.l.bf16 %v119
  %v216 = vunpack.c.l.bf16 %v120
  %v217 = vunpack.c.l.bf16 %v121
  %v218 = vunpack.c.l.bf16 %v122
  %v219 = vunpack.c.l.bf16 %v123
  %v220 = vunpack.c.l.bf16 %v124
  %v221 = vunpack.c.l.bf16 %v125
  %v222 = vunpack.c.l.bf16 %v126
  %v223 = vunpack.c.l.bf16 %v127
  %v224 = vunpack.c.l.bf16 %v128
  %v225 = vunpack.c.l.bf16 %v129
  %v226 = vunpack.c.l.bf16 %v130
  %v227 = vunpack.c.l.bf16 %v131
  %v228 = vunpack.c.l.bf16 %v132
  %v229 = vunpack.c.l.bf16 %v133
  %v230 = vunpack.c.l.bf16 %v134
  %v231 = vunpack.c.l.bf16 %v135
  %v232 = vunpack.c.l.bf16 %v136
  %v233 = vunpack.c.l.bf16 %v137
  %v234 = vunpack.c.l.bf16 %v138
  %v235 = vunpack.c.l.bf16 %v139
  %v236 = vunpack.c.l.bf16 %v140
  %v237 = vunpack.c.l.bf16 %v141
  %v238 = vunpack.c.l.bf16 %v142
  %v239 = vunpack.c.l.bf16 %v143
  %v240 = vunpack.c.l.bf16 %v144
  %v241 = vunpack.c.l.bf16 %v145
  %v242 = vld [vmem:[%s2] sm:$0xff]
  %v243 = vld [vmem:[%s2 + $0x8] sm:$0xff]
  %v244 = vld [vmem:[%s2 + $0x10] sm:$0xff]
  %v245 = vld [vmem:[%s2 + $0x18] sm:$0xff]
  %247 = vset.pattern.permute.xlu0 0
  %248 = vperm.xlu0 %247, %v242
  %v249 = vpop.permute.xlu0 %248
  %252 = vset.pattern.permute.xlu0 0
  %253 = vperm.xlu0 %252, %v243
  %v254 = vpop.permute.xlu0 %253
  %257 = vset.pattern.permute.xlu0 0
  %258 = vperm.xlu0 %257, %v244
  %v259 = vpop.permute.xlu0 %258
  %262 = vset.pattern.permute.xlu0 0
  %263 = vperm.xlu0 %262, %v245
  %v264 = vpop.permute.xlu0 %263
  %266 = vmatprep.subr.mxu0 0.0
  %267 = vmatpush1.msra.mxu0 %v146
  %268 = vmatprep.subr.mxu0 0.0
  %269 = vmatpush1.msra.mxu0 %v147
  %270 = vmatprep.subr.mxu0 0.0
  %271 = vmatpush1.msra.mxu0 %v148
  %272 = vmatprep.subr.mxu0 0.0
  %273 = vmatpush1.msra.mxu0 %v149
  %274 = vmatprep.subr.mxu0 0.0
  %275 = vmatpush1.msra.mxu0 %v150
  %276 = vmatprep.subr.mxu0 0.0
  %277 = vmatpush1.msra.mxu0 %v151
  %278 = vmatprep.subr.mxu0 0.0
  %279 = vmatpush1.msra.mxu0 %v152
  %280 = vmatprep.subr.mxu0 0.0
  %281 = vmatpush1.msra.mxu0 %v153
  %282 = vmatprep.subr.mxu0 0.0
  %283 = vmatpush1.msra.mxu0 %v154
  %284 = vmatprep.subr.mxu0 0.0
  %285 = vmatpush1.msra.mxu0 %v155
  %286 = vmatprep.subr.mxu0 0.0
  %287 = vmatpush1.msra.mxu0 %v156
  %288 = vmatprep.subr.mxu0 0.0
  %289 = vmatpush1.msra.mxu0 %v157
  %290 = vmatprep.subr.mxu0 0.0
  %291 = vmatpush1.msra.mxu0 %v158
  %292 = vmatprep.subr.mxu0 0.0
  %293 = vmatpush1.msra.mxu0 %v159
  %294 = vmatprep.subr.mxu0 0.0
  %295 = vmatpush1.msra.mxu0 %v160
  %296 = vmatprep.subr.mxu0 0.0
  %297 = vmatpush1.msra.mxu0 %v161
  %298 = vmatprep.subr.mxu0 0.0
  %299 = vmatpush1.msra.mxu0 %v162
  %300 = vmatprep.subr.mxu0 0.0
  %301 = vmatpush1.msra.mxu0 %v163
  %302 = vmatprep.subr.mxu0 0.0
  %303 = vmatpush1.msra.mxu0 %v164
  %304 = vmatprep.subr.mxu0 0.0
  %305 = vmatpush1.msra.mxu0 %v165
  %306 = vmatprep.subr.mxu0 0.0
  %307 = vmatpush1.msra.mxu0 %v166
  %308 = vmatprep.subr.mxu0 0.0
  %309 = vmatpush1.msra.mxu0 %v167
  %310 = vmatprep.subr.mxu0 0.0
  %311 = vmatpush1.msra.mxu0 %v168
  %312 = vmatprep.subr.mxu0 0.0
  %313 = vmatpush1.msra.mxu0 %v169
  %314 = vmatprep.subr.mxu0 0.0
  %315 = vmatpush1.msra.mxu0 %v170
  %316 = vmatprep.subr.mxu0 0.0
  %317 = vmatpush1.msra.mxu0 %v171
  %318 = vmatprep.subr.mxu0 0.0
  %319 = vmatpush1.msra.mxu0 %v172
  %320 = vmatprep.subr.mxu0 0.0
  %321 = vmatpush1.msra.mxu0 %v173
  %322 = vmatprep.subr.mxu0 0.0
  %323 = vmatpush1.msra.mxu0 %v174
  %324 = vmatprep.subr.mxu0 0.0
  %325 = vmatpush1.msra.mxu0 %v175
  %326 = vmatprep.subr.mxu0 0.0
  %327 = vmatpush1.msra.mxu0 %v176
  %328 = vmatprep.subr.mxu0 0.0
  %329 = vmatpush1.msra.mxu0 %v177
  %330 = vmatprep.mubr.f32.mxu0 %v27
  %331 = vmatmul.mubr.f32.gmra.mrb[0].mxu0 %v26
  %v332 = vpop.f32.mrb[0].mxu0
  %v333 = vadd.f32 %v249, %v332
  %v334 = vpop.f32.mrb[0].mxu0
  %335 = vmatprep.mubr.f32.mxu0 %v33
  %336 = vmatmul.mubr.f32.gmra.mrb[0].mxu0 %v32
  %v337 = vpop.f32.mrb[0].mxu0
  %v338 = vadd.f32 %v254, %v337
  %v339 = vpop.f32.mrb[0].mxu0
  %340 = vmatprep.mubr.f32.mxu0 %v39
  %341 = vmatmul.mubr.f32.gmra.mrb[0].mxu0 %v38
  %v342 = vpop.f32.mrb[0].mxu0
  %v343 = vadd.f32 %v259, %v342
  %v344 = vpop.f32.mrb[0].mxu0
  %345 = vmatprep.mubr.f32.mxu0 %v45
  %346 = vmatmul.mubr.f32.gmra.mrb[0].mxu0 %v44
  %v347 = vpop.f32.mrb[0].mxu0
  %v348 = vadd.f32 %v264, %v347
  %v349 = vpop.f32.mrb[0].mxu0
  %350 = vdwg.mxu0
  %351 = vmatprep.subr.mxu0 0.0
  %352 = vmatpush1.msra.mxu0 %v178
  %353 = vmatprep.subr.mxu0 0.0
  %354 = vmatpush1.msra.mxu0 %v179
  %355 = vmatprep.subr.mxu0 0.0
  %356 = vmatpush1.msra.mxu0 %v180
  %357 = vmatprep.subr.mxu0 0.0
  %358 = vmatpush1.msra.mxu0 %v181
  %359 = vmatprep.subr.mxu0 0.0
  %360 = vmatpush1.msra.mxu0 %v182
  %361 = vmatprep.subr.mxu0 0.0
  %362 = vmatpush1.msra.mxu0 %v183
  %363 = vmatprep.subr.mxu0 0.0
  %364 = vmatpush1.msra.mxu0 %v184
  %365 = vmatprep.subr.mxu0 0.0
  %366 = vmatpush1.msra.mxu0 %v185
  %367 = vmatprep.subr.mxu0 0.0
  %368 = vmatpush1.msra.mxu0 %v186
  %369 = vmatprep.subr.mxu0 0.0
  %370 = vmatpush1.msra.mxu0 %v187
  %371 = vmatprep.subr.mxu0 0.0
  %372 = vmatpush1.msra.mxu0 %v188
  %373 = vmatprep.subr.mxu0 0.0
  %374 = vmatpush1.msra.mxu0 %v189
  %375 = vmatprep.subr.mxu0 0.0
  %376 = vmatpush1.msra.mxu0 %v190
  %377 = vmatprep.subr.mxu0 0.0
  %378 = vmatpush1.msra.mxu0 %v191
  %379 = vmatprep.subr.mxu0 0.0
  %380 = vmatpush1.msra.mxu0 %v192
  %381 = vmatprep.subr.mxu0 0.0
  %382 = vmatpush1.msra.mxu0 %v193
  %383 = vmatprep.subr.mxu0 0.0
  %384 = vmatpush1.msra.mxu0 %v194
  %385 = vmatprep.subr.mxu0 0.0
  %386 = vmatpush1.msra.mxu0 %v195
  %387 = vmatprep.subr.mxu0 0.0
  %388 = vmatpush1.msra.mxu0 %v196
  %389 = vmatprep.subr.mxu0 0.0
  %390 = vmatpush1.msra.mxu0 %v197
  %391 = vmatprep.subr.mxu0 0.0
  %392 = vmatpush1.msra.mxu0 %v198
  %393 = vmatprep.subr.mxu0 0.0
  %394 = vmatpush1.msra.mxu0 %v199
  %395 = vmatprep.subr.mxu0 0.0
  %396 = vmatpush1.msra.mxu0 %v200
  %397 = vmatprep.subr.mxu0 0.0
  %398 = vmatpush1.msra.mxu0 %v201
  %399 = vmatprep.subr.mxu0 0.0
  %400 = vmatpush1.msra.mxu0 %v202
  %401 = vmatprep.subr.mxu0 0.0
  %402 = vmatpush1.msra.mxu0 %v203
  %403 = vmatprep.subr.mxu0 0.0
  %404 = vmatpush1.msra.mxu0 %v204
  %405 = vmatprep.subr.mxu0 0.0
  %406 = vmatpush1.msra.mxu0 %v205
  %407 = vmatprep.subr.mxu0 0.0
  %408 = vmatpush1.msra.mxu0 %v206
  %409 = vmatprep.subr.mxu0 0.0
  %410 = vmatpush1.msra.mxu0 %v207
  %411 = vmatprep.subr.mxu0 0.0
  %412 = vmatpush1.msra.mxu0 %v208
  %413 = vmatprep.subr.mxu0 0.0
  %414 = vmatpush1.msra.mxu0 %v209
  %415 = vmatprep.mubr.f32.mxu0 %v29
  %416 = vmatmul.mubr.f32.gmra.mrb[0].mxu0 %v28
  %v417 = vpop.f32.mrb[0].mxu0
  %v418 = vadd.f32 %v333, %v417
  %v419 = vpop.f32.mrb[0].mxu0
  %420 = vmatprep.mubr.f32.mxu0 %v35
  %421 = vmatmul.mubr.f32.gmra.mrb[0].mxu0 %v34
  %v422 = vpop.f32.mrb[0].mxu0
  %v423 = vadd.f32 %v338, %v422
  %v424 = vpop.f32.mrb[0].mxu0
  %425 = vmatprep.mubr.f32.mxu0 %v41
  %426 = vmatmul.mubr.f32.gmra.mrb[0].mxu0 %v40
  %v427 = vpop.f32.mrb[0].mxu0
  %v428 = vadd.f32 %v343, %v427
  %v429 = vpop.f32.mrb[0].mxu0
  %430 = vmatprep.mubr.f32.mxu0 %v47
  %431 = vmatmul.mubr.f32.gmra.mrb[0].mxu0 %v46
  %v432 = vpop.f32.mrb[0].mxu0
  %v433 = vadd.f32 %v348, %v432
  %v434 = vpop.f32.mrb[0].mxu0
  %435 = vdwg.mxu0
  %436 = vmatprep.subr.mxu0 0.0
  %437 = vmatpush1.msra.mxu0 %v210
  %438 = vmatprep.subr.mxu0 0.0
  %439 = vmatpush1.msra.mxu0 %v211
  %440 = vmatprep.subr.mxu0 0.0
  %441 = vmatpush1.msra.mxu0 %v212
  %442 = vmatprep.subr.mxu0 0.0
  %443 = vmatpush1.msra.mxu0 %v213
  %444 = vmatprep.subr.mxu0 0.0
  %445 = vmatpush1.msra.mxu0 %v214
  %446 = vmatprep.subr.mxu0 0.0
  %447 = vmatpush1.msra.mxu0 %v215
  %448 = vmatprep.subr.mxu0 0.0
  %449 = vmatpush1.msra.mxu0 %v216
  %450 = vmatprep.subr.mxu0 0.0
  %451 = vmatpush1.msra.mxu0 %v217
  %452 = vmatprep.subr.mxu0 0.0
  %453 = vmatpush1.msra.mxu0 %v218
  %454 = vmatprep.subr.mxu0 0.0
  %455 = vmatpush1.msra.mxu0 %v219
  %456 = vmatprep.subr.mxu0 0.0
  %457 = vmatpush1.msra.mxu0 %v220
  %458 = vmatprep.subr.mxu0 0.0
  %459 = vmatpush1.msra.mxu0 %v221
  %460 = vmatprep.subr.mxu0 0.0
  %461 = vmatpush1.msra.mxu0 %v222
  %462 = vmatprep.subr.mxu0 0.0
  %463 = vmatpush1.msra.mxu0 %v223
  %464 = vmatprep.subr.mxu0 0.0
  %465 = vmatpush1.msra.mxu0 %v224
  %466 = vmatprep.subr.mxu0 0.0
  %467 = vmatpush1.msra.mxu0 %v225
  %468 = vmatprep.subr.mxu0 0.0
  %469 = vmatpush1.msra.mxu0 %v226
  %470 = vmatprep.subr.mxu0 0.0
  %471 = vmatpush1.msra.mxu0 %v227
  %472 = vmatprep.subr.mxu0 0.0
  %473 = vmatpush1.msra.mxu0 %v228
  %474 = vmatprep.subr.mxu0 0.0
  %475 = vmatpush1.msra.mxu0 %v229
  %476 = vmatprep.subr.mxu0 0.0
  %477 = vmatpush1.msra.mxu0 %v230
  %478 = vmatprep.subr.mxu0 0.0
  %479 = vmatpush1.msra.mxu0 %v231
  %480 = vmatprep.subr.mxu0 0.0
  %481 = vmatpush1.msra.mxu0 %v232
  %482 = vmatprep.subr.mxu0 0.0
  %483 = vmatpush1.msra.mxu0 %v233
  %484 = vmatprep.subr.mxu0 0.0
  %485 = vmatpush1.msra.mxu0 %v234
  %486 = vmatprep.subr.mxu0 0.0
  %487 = vmatpush1.msra.mxu0 %v235
  %488 = vmatprep.subr.mxu0 0.0
  %489 = vmatpush1.msra.mxu0 %v236
  %490 = vmatprep.subr.mxu0 0.0
  %491 = vmatpush1.msra.mxu0 %v237
  %492 = vmatprep.subr.mxu0 0.0
  %493 = vmatpush1.msra.mxu0 %v238
  %494 = vmatprep.subr.mxu0 0.0
  %495 = vmatpush1.msra.mxu0 %v239
  %496 = vmatprep.subr.mxu0 0.0
  %497 = vmatpush1.msra.mxu0 %v240
  %498 = vmatprep.subr.mxu0 0.0
  %499 = vmatpush1.msra.mxu0 %v241
  %500 = vmatprep.mubr.f32.mxu0 %v31
  %501 = vmatmul.mubr.f32.gmra.mrb[0].mxu0 %v30
  %v502 = vpop.f32.mrb[0].mxu0
  %v503 = vadd.f32 %v418, %v502
  %v504 = vpop.f32.mrb[0].mxu0
  %505 = vmatprep.mubr.f32.mxu0 %v37
  %506 = vmatmul.mubr.f32.gmra.mrb[0].mxu0 %v36
  %v507 = vpop.f32.mrb[0].mxu0
  %v508 = vadd.f32 %v423, %v507
  %v509 = vpop.f32.mrb[0].mxu0
  %510 = vmatprep.mubr.f32.mxu0 %v43
  %511 = vmatmul.mubr.f32.gmra.mrb[0].mxu0 %v42
  %v512 = vpop.f32.mrb[0].mxu0
  %v513 = vadd.f32 %v428, %v512
  %v514 = vpop.f32.mrb[0].mxu0
  %515 = vmatprep.mubr.f32.mxu0 %v49
  %516 = vmatmul.mubr.f32.gmra.mrb[0].mxu0 %v48
  %v517 = vpop.f32.mrb[0].mxu0
  %v518 = vadd.f32 %v433, %v517
  %v519 = vpop.f32.mrb[0].mxu0
  %520 = vdwg.mxu0
  %vm521 = vcmask 130048
  %522 = vst.msk [vmem:[%s3] sm:$0xff] %vm521, %v503
  %523 = vst.msk [vmem:[%s3 + $0x8] sm:$0xff] %vm521, %v508
  %524 = vst.msk [vmem:[%s3 + $0x10] sm:$0xff] %vm521, %v513
  %525 = vst.msk [vmem:[%s3 + $0x18] sm:$0xff] %vm521, %v518
  // Predicated region
  $region14: #{encoder_model_forward.1} parent=0 // pred_check
    _
  $region15: #{encoder_model_forward.1} parent=0 // pred_check_branch
    %527 = sbr.rel (0) target = $region17
  $region16: #{encoder_model_forward.1} parent=0 // pred_region
    _
  $region17: #{encoder_model_forward.1} parent=0 // pred_fallthru
    _
  // Predicated region
  $region18: #{encoder_model_forward.1} parent=0 // pred_check
    _
  $region19: #{encoder_model_forward.1} parent=0 // pred_check_branch
    %529 = sbr.rel (0) target = $region21
  $region20: #{encoder_model_forward.1} parent=0 // pred_region
    _
  $region21: #{encoder_model_forward.1} parent=0 // pred_fallthru
    _

</llo_original>
